<compile_context>
chip_gen: v7x
topology: tpu7x:2x2x1
jax: 0.10.0
libtpu: 0.0.40
codegen_flags: <defaults>
</compile_context>

<pallas_src>
import jax
import jax.numpy as jnp
from jax import lax
from jax.experimental import pallas as pl
from jax.experimental.pallas import tpu as pltpu


def lstm_last_fc_kernel(x_ref, wih_ref, whh_ref, b_ref, wfc_ref, bfc_ref,
                        out_ref, gx_scr):
    # Static shapes.
    TB, D = x_ref.shape
    H = whh_ref.shape[0]
    B = out_ref.shape[0]
    T = TB // B

    # ---- Hoisted input projection: one MXU pass covering all timesteps. ----
    # [T*B, D] @ [D, 4H] + [1, 4H]  (bias broadcast exactly once, outside the recurrence)
    gx_scr[...] = (jnp.dot(x_ref[...], wih_ref[...],
                           preferred_element_type=jnp.float32)
                   + b_ref[...])

    # Hoist the recurrent weight load out of the loop.
    whh = whh_ref[...]  # [H, 4H]

    def step(t, carry):
        h, c = carry
        start = t * B
        if B % 8 == 0:
            start = pl.multiple_of(start, 8)  # sublane-aligned dynamic slice hint
        gates = (gx_scr[pl.ds(start, B), :]
                 + jnp.dot(h, whh, preferred_element_type=jnp.float32))  # [B, 4H]
        # One EUP sigmoid over the full gate block; tanh only on the g slice.
        sig = jax.nn.sigmoid(gates)
        i_g = sig[:, 0 * H:1 * H]
        f_g = sig[:, 1 * H:2 * H]
        o_g = sig[:, 3 * H:4 * H]
        g_g = jnp.tanh(gates[:, 2 * H:3 * H])
        c_new = f_g * c + i_g * g_g
        h_new = o_g * jnp.tanh(c_new)
        return (h_new, c_new)

    h0 = jnp.zeros((B, H), jnp.float32)
    c0 = jnp.zeros((B, H), jnp.float32)
    h_last, _ = lax.fori_loop(0, T, step, (h0, c0), unroll=True)

    # ---- Final Linear(H, 1): VPU multiply + lane reduction (avoid N=1 MXU matmul). ----
    out_ref[...] = (jnp.sum(h_last * wfc_ref[...], axis=-1, keepdims=True)
                    + bfc_ref[...]).astype(out_ref.dtype)


def lstm_model_forward(x_btd, w_ih, w_hh, b_ih, b_hh, w_fc, b_fc):
    """x_btd: [B, T, D] (batch_first, like the PyTorch module). Returns [B, 1]."""
    B, T, D = x_btd.shape
    H4 = w_ih.shape[0]
    H = H4 // 4

    # Layout glue only: time-major, flatten (T, B) -> rows so the hoisted input projection
    # is a single row-major [T*B, D] @ [D, 4H] matmul; weights pre-transposed.
    # NOTE: on v6e/v7x the weight casts below could be .astype(jnp.bfloat16) (MXU-native,
    # halves weight bytes / vreg pressure); kept f32 here to match the f32 reference check.
    x_rows = jnp.transpose(x_btd, (1, 0, 2)).reshape(T * B, D).astype(jnp.float32)
    wih_t = jnp.transpose(w_ih).astype(jnp.float32)               # [D, 4H]
    whh_t = jnp.transpose(w_hh).astype(jnp.float32)               # [H, 4H]
    b_all = (b_ih + b_hh).reshape(1, 4 * H).astype(jnp.float32)   # [1, 4H]
    wfc_row = w_fc.reshape(1, H).astype(jnp.float32)              # [1, H] (no transpose)
    bfc = b_fc.reshape(1, 1).astype(jnp.float32)                  # [1, 1]

    vmem = pl.BlockSpec(memory_space=pltpu.MemorySpace.VMEM)
    out = pl.pallas_call(
        lstm_last_fc_kernel,
        out_shape=jax.ShapeDtypeStruct((B, 1), jnp.float32),
        in_specs=[vmem] * 6,
        out_specs=vmem,
        scratch_shapes=[
            pltpu.VMEM((T * B, 4 * H), jnp.float32),  # precomputed x-projection gates
        ],
    )(x_rows, wih_t, whh_t, b_all, wfc_row, bfc)
    return out
    # TODO(synk): at production shapes (large B), shard the batch across v7x's two
    # TensorCores (core_map over a leading B axis); T is inherently serial.


def lstm_model_reference(x_btd, w_ih, w_hh, b_ih, b_hh, w_fc, b_fc):
    """Pure-JAX reference replicating torch.nn.LSTM (1 layer) + Linear semantics."""
    B, T, D = x_btd.shape
    H = w_hh.shape[1]

    def step(carry, x_t):
        h, c = carry
        gates = x_t @ w_ih.T + b_ih + h @ w_hh.T + b_hh
        i = jax.nn.sigmoid(gates[:, 0 * H:1 * H])
        f = jax.nn.sigmoid(gates[:, 1 * H:2 * H])
        g = jnp.tanh(gates[:, 2 * H:3 * H])
        o = jax.nn.sigmoid(gates[:, 3 * H:4 * H])
        c_new = f * c + i * g
        h_new = o * jnp.tanh(c_new)
        return (h_new, c_new), None

    h0 = jnp.zeros((B, H), jnp.float32)
    c0 = jnp.zeros((B, H), jnp.float32)
    (h_last, _), _ = lax.scan(step, (h0, c0), jnp.transpose(x_btd, (1, 0, 2)))
    return h_last @ w_fc.T + b_fc


if __name__ == "__main__":
    # Small shapes consistent with the module: OHLCV-style features (D=5),
    # hidden_dim=64 (as in the source file), short sequence, small batch.
    B, T, D, H = 8, 8, 5, 64

    key = jax.random.PRNGKey(0)
    kx, k1, k2, k3, k4, k5, k6 = jax.random.split(key, 7)

    # Deterministic parameter init (PyTorch-style uniform(-1/sqrt(H), 1/sqrt(H))).
    s = 1.0 / jnp.sqrt(jnp.float32(H))
    x = jax.random.normal(kx, (B, T, D), jnp.float32)
    w_ih = jax.random.uniform(k1, (4 * H, D), jnp.float32, -s, s)
    w_hh = jax.random.uniform(k2, (4 * H, H), jnp.float32, -s, s)
    b_ih = jax.random.uniform(k3, (4 * H,), jnp.float32, -s, s)
    b_hh = jax.random.uniform(k4, (4 * H,), jnp.float32, -s, s)
    w_fc = jax.random.uniform(k5, (1, H), jnp.float32, -s, s)
    b_fc = jax.random.uniform(k6, (1,), jnp.float32, -s, s)

    out = lstm_model_forward(x, w_ih, w_hh, b_ih, b_hh, w_fc, b_fc)
    out = jax.block_until_ready(out)

    ref = lstm_model_reference(x, w_ih, w_hh, b_ih, b_hh, w_fc, b_fc)
    assert out.shape == (B, 1), out.shape
    assert jnp.allclose(out, ref, atol=2e-5, rtol=2e-5), (out, ref)

    print("KERNEL_OK")
</pallas_src>

<mosaic_0001>
module attributes {stable_mosaic.version = 11 : i64} {
  func.func @lstm_last_fc_kernel(%arg0: memref<64x5xf32, #tpu.memory_space<vmem>>, %arg1: memref<5x256xf32, #tpu.memory_space<vmem>>, %arg2: memref<64x256xf32, #tpu.memory_space<vmem>>, %arg3: memref<1x256xf32, #tpu.memory_space<vmem>>, %arg4: memref<1x64xf32, #tpu.memory_space<vmem>>, %arg5: memref<1x1xf32, #tpu.memory_space<vmem>>, %arg6: memref<8x1xf32, #tpu.memory_space<vmem>>, %arg7: memref<64x256xf32, #tpu.memory_space<vmem>>) attributes {dimension_semantics = [], scalar_prefetch = 0 : i64, scratch_operands = 1 : i64, tpu.core_type = #tpu.core_type<tc>} {
    %c0 = arith.constant 0 : index
    %c0_0 = arith.constant 0 : index
    %0 = vector.load %arg0[%c0, %c0_0] : memref<64x5xf32, #tpu.memory_space<vmem>>, vector<64x5xf32>
    %c0_1 = arith.constant 0 : index
    %c0_2 = arith.constant 0 : index
    %1 = vector.load %arg1[%c0_1, %c0_2] : memref<5x256xf32, #tpu.memory_space<vmem>>, vector<5x256xf32>
    %cst = arith.constant dense<0.000000e+00> : vector<64x256xf32>
    %2 = tpu.matmul %0, %1, %cst {dimension_numbers = #tpu.dot_dimension_numbers<[1], [0], [0], [1], [0, 0, 1, 1], [], []>} : vector<64x5xf32>, vector<5x256xf32>, vector<64x256xf32> -> vector<64x256xf32>
    %c0_3 = arith.constant 0 : index
    %c0_4 = arith.constant 0 : index
    %3 = vector.load %arg3[%c0_3, %c0_4] : memref<1x256xf32, #tpu.memory_space<vmem>>, vector<1x256xf32>
    %4 = vector.broadcast %3 : vector<1x256xf32> to vector<64x256xf32>
    %5 = arith.addf %2, %4 : vector<64x256xf32>
    %c0_5 = arith.constant 0 : index
    %c0_6 = arith.constant 0 : index
    %6 = vector.load %arg7[%c0_5, %c0_6] : memref<64x256xf32, #tpu.memory_space<vmem>>, vector<64x256xf32>
    tpu.vector_store %arg7[%c0_5, %c0_6], %5 {strides = array<i32>} : memref<64x256xf32, #tpu.memory_space<vmem>>, vector<64x256xf32>,
    %c0_7 = arith.constant 0 : index
    %c0_8 = arith.constant 0 : index
    %7 = vector.load %arg2[%c0_7, %c0_8] : memref<64x256xf32, #tpu.memory_space<vmem>>, vector<64x256xf32>
    %cst_9 = arith.constant 0.000000e+00 : f32
    %8 = vector.broadcast %cst_9 : f32 to vector<8x64xf32>
    %cst_10 = arith.constant 0.000000e+00 : f32
    %9 = vector.broadcast %cst_10 : f32 to vector<8x64xf32>
    %c0_i32 = arith.constant 0 : i32
    %c8_i32 = arith.constant 8 : i32
    %10 = arith.muli %c0_i32, %c8_i32 : i32
    %11 = tpu.assume_multiple %10, 8 : i32
    %12 = arith.index_cast %11 : i32 to index
    %c0_11 = arith.constant 0 : index
    %13 = vector.load %arg7[%12, %c0_11] : memref<64x256xf32, #tpu.memory_space<vmem>>, vector<8x256xf32>
    %cst_12 = arith.constant dense<0.000000e+00> : vector<8x256xf32>
    %14 = tpu.matmul %8, %7, %cst_12 {dimension_numbers = #tpu.dot_dimension_numbers<[1], [0], [0], [1], [0, 0, 1, 1], [], []>} : vector<8x64xf32>, vector<64x256xf32>, vector<8x256xf32> -> vector<8x256xf32>
    %15 = arith.addf %13, %14 : vector<8x256xf32>
    %16 = arith.negf %15 : vector<8x256xf32>
    %17 = math.exp %16 : vector<8x256xf32>
    %cst_13 = arith.constant 1.000000e+00 : f32
    %18 = vector.broadcast %cst_13 : f32 to vector<8x256xf32>
    %19 = arith.addf %18, %17 : vector<8x256xf32>
    %20 = arith.divf %18, %19 : vector<8x256xf32>
    %21 = vector.extract_strided_slice %20 {offsets = [0, 0], sizes = [8, 64], strides = [1, 1]} : vector<8x256xf32> to vector<8x64xf32>
    %22 = vector.extract_strided_slice %20 {offsets = [0, 64], sizes = [8, 64], strides = [1, 1]} : vector<8x256xf32> to vector<8x64xf32>
    %23 = vector.extract_strided_slice %20 {offsets = [0, 192], sizes = [8, 64], strides = [1, 1]} : vector<8x256xf32> to vector<8x64xf32>
    %24 = vector.extract_strided_slice %15 {offsets = [0, 128], sizes = [8, 64], strides = [1, 1]} : vector<8x256xf32> to vector<8x64xf32>
    %25 = math.tanh %24 : vector<8x64xf32>
    %26 = arith.mulf %22, %9 : vector<8x64xf32>
    %27 = arith.mulf %21, %25 : vector<8x64xf32>
    %28 = arith.addf %26, %27 : vector<8x64xf32>
    %29 = math.tanh %28 : vector<8x64xf32>
    %30 = arith.mulf %23, %29 : vector<8x64xf32>
    %c1_i32 = arith.constant 1 : i32
    %c8_i32_14 = arith.constant 8 : i32
    %31 = arith.muli %c1_i32, %c8_i32_14 : i32
    %32 = tpu.assume_multiple %31, 8 : i32
    %33 = arith.index_cast %32 : i32 to index
    %c0_15 = arith.constant 0 : index
    %34 = vector.load %arg7[%33, %c0_15] : memref<64x256xf32, #tpu.memory_space<vmem>>, vector<8x256xf32>
    %cst_16 = arith.constant dense<0.000000e+00> : vector<8x256xf32>
    %35 = tpu.matmul %30, %7, %cst_16 {dimension_numbers = #tpu.dot_dimension_numbers<[1], [0], [0], [1], [0, 0, 1, 1], [], []>} : vector<8x64xf32>, vector<64x256xf32>, vector<8x256xf32> -> vector<8x256xf32>
    %36 = arith.addf %34, %35 : vector<8x256xf32>
    %37 = arith.negf %36 : vector<8x256xf32>
    %38 = math.exp %37 : vector<8x256xf32>
    %cst_17 = arith.constant 1.000000e+00 : f32
    %39 = vector.broadcast %cst_17 : f32 to vector<8x256xf32>
    %40 = arith.addf %39, %38 : vector<8x256xf32>
    %41 = arith.divf %39, %40 : vector<8x256xf32>
    %42 = vector.extract_strided_slice %41 {offsets = [0, 0], sizes = [8, 64], strides = [1, 1]} : vector<8x256xf32> to vector<8x64xf32>
    %43 = vector.extract_strided_slice %41 {offsets = [0, 64], sizes = [8, 64], strides = [1, 1]} : vector<8x256xf32> to vector<8x64xf32>
    %44 = vector.extract_strided_slice %41 {offsets = [0, 192], sizes = [8, 64], strides = [1, 1]} : vector<8x256xf32> to vector<8x64xf32>
    %45 = vector.extract_strided_slice %36 {offsets = [0, 128], sizes = [8, 64], strides = [1, 1]} : vector<8x256xf32> to vector<8x64xf32>
    %46 = math.tanh %45 : vector<8x64xf32>
    %47 = arith.mulf %43, %28 : vector<8x64xf32>
    %48 = arith.mulf %42, %46 : vector<8x64xf32>
    %49 = arith.addf %47, %48 : vector<8x64xf32>
    %50 = math.tanh %49 : vector<8x64xf32>
    %51 = arith.mulf %44, %50 : vector<8x64xf32>
    %c2_i32 = arith.constant 2 : i32
    %c8_i32_18 = arith.constant 8 : i32
    %52 = arith.muli %c2_i32, %c8_i32_18 : i32
    %53 = tpu.assume_multiple %52, 8 : i32
    %54 = arith.index_cast %53 : i32 to index
    %c0_19 = arith.constant 0 : index
    %55 = vector.load %arg7[%54, %c0_19] : memref<64x256xf32, #tpu.memory_space<vmem>>, vector<8x256xf32>
    %cst_20 = arith.constant dense<0.000000e+00> : vector<8x256xf32>
    %56 = tpu.matmul %51, %7, %cst_20 {dimension_numbers = #tpu.dot_dimension_numbers<[1], [0], [0], [1], [0, 0, 1, 1], [], []>} : vector<8x64xf32>, vector<64x256xf32>, vector<8x256xf32> -> vector<8x256xf32>
    %57 = arith.addf %55, %56 : vector<8x256xf32>
    %58 = arith.negf %57 : vector<8x256xf32>
    %59 = math.exp %58 : vector<8x256xf32>
    %cst_21 = arith.constant 1.000000e+00 : f32
    %60 = vector.broadcast %cst_21 : f32 to vector<8x256xf32>
    %61 = arith.addf %60, %59 : vector<8x256xf32>
    %62 = arith.divf %60, %61 : vector<8x256xf32>
    %63 = vector.extract_strided_slice %62 {offsets = [0, 0], sizes = [8, 64], strides = [1, 1]} : vector<8x256xf32> to vector<8x64xf32>
    %64 = vector.extract_strided_slice %62 {offsets = [0, 64], sizes = [8, 64], strides = [1, 1]} : vector<8x256xf32> to vector<8x64xf32>
    %65 = vector.extract_strided_slice %62 {offsets = [0, 192], sizes = [8, 64], strides = [1, 1]} : vector<8x256xf32> to vector<8x64xf32>
    %66 = vector.extract_strided_slice %57 {offsets = [0, 128], sizes = [8, 64], strides = [1, 1]} : vector<8x256xf32> to vector<8x64xf32>
    %67 = math.tanh %66 : vector<8x64xf32>
    %68 = arith.mulf %64, %49 : vector<8x64xf32>
    %69 = arith.mulf %63, %67 : vector<8x64xf32>
    %70 = arith.addf %68, %69 : vector<8x64xf32>
    %71 = math.tanh %70 : vector<8x64xf32>
    %72 = arith.mulf %65, %71 : vector<8x64xf32>
    %c3_i32 = arith.constant 3 : i32
    %c8_i32_22 = arith.constant 8 : i32
    %73 = arith.muli %c3_i32, %c8_i32_22 : i32
    %74 = tpu.assume_multiple %73, 8 : i32
    %75 = arith.index_cast %74 : i32 to index
    %c0_23 = arith.constant 0 : index
    %76 = vector.load %arg7[%75, %c0_23] : memref<64x256xf32, #tpu.memory_space<vmem>>, vector<8x256xf32>
    %cst_24 = arith.constant dense<0.000000e+00> : vector<8x256xf32>
    %77 = tpu.matmul %72, %7, %cst_24 {dimension_numbers = #tpu.dot_dimension_numbers<[1], [0], [0], [1], [0, 0, 1, 1], [], []>} : vector<8x64xf32>, vector<64x256xf32>, vector<8x256xf32> -> vector<8x256xf32>
    %78 = arith.addf %76, %77 : vector<8x256xf32>
    %79 = arith.negf %78 : vector<8x256xf32>
    %80 = math.exp %79 : vector<8x256xf32>
    %cst_25 = arith.constant 1.000000e+00 : f32
    %81 = vector.broadcast %cst_25 : f32 to vector<8x256xf32>
    %82 = arith.addf %81, %80 : vector<8x256xf32>
    %83 = arith.divf %81, %82 : vector<8x256xf32>
    %84 = vector.extract_strided_slice %83 {offsets = [0, 0], sizes = [8, 64], strides = [1, 1]} : vector<8x256xf32> to vector<8x64xf32>
    %85 = vector.extract_strided_slice %83 {offsets = [0, 64], sizes = [8, 64], strides = [1, 1]} : vector<8x256xf32> to vector<8x64xf32>
    %86 = vector.extract_strided_slice %83 {offsets = [0, 192], sizes = [8, 64], strides = [1, 1]} : vector<8x256xf32> to vector<8x64xf32>
    %87 = vector.extract_strided_slice %78 {offsets = [0, 128], sizes = [8, 64], strides = [1, 1]} : vector<8x256xf32> to vector<8x64xf32>
    %88 = math.tanh %87 : vector<8x64xf32>
    %89 = arith.mulf %85, %70 : vector<8x64xf32>
    %90 = arith.mulf %84, %88 : vector<8x64xf32>
    %91 = arith.addf %89, %90 : vector<8x64xf32>
    %92 = math.tanh %91 : vector<8x64xf32>
    %93 = arith.mulf %86, %92 : vector<8x64xf32>
    %c4_i32 = arith.constant 4 : i32
    %c8_i32_26 = arith.constant 8 : i32
    %94 = arith.muli %c4_i32, %c8_i32_26 : i32
    %95 = tpu.assume_multiple %94, 8 : i32
    %96 = arith.index_cast %95 : i32 to index
    %c0_27 = arith.constant 0 : index
    %97 = vector.load %arg7[%96, %c0_27] : memref<64x256xf32, #tpu.memory_space<vmem>>, vector<8x256xf32>
    %cst_28 = arith.constant dense<0.000000e+00> : vector<8x256xf32>
    %98 = tpu.matmul %93, %7, %cst_28 {dimension_numbers = #tpu.dot_dimension_numbers<[1], [0], [0], [1], [0, 0, 1, 1], [], []>} : vector<8x64xf32>, vector<64x256xf32>, vector<8x256xf32> -> vector<8x256xf32>
    %99 = arith.addf %97, %98 : vector<8x256xf32>
    %100 = arith.negf %99 : vector<8x256xf32>
    %101 = math.exp %100 : vector<8x256xf32>
    %cst_29 = arith.constant 1.000000e+00 : f32
    %102 = vector.broadcast %cst_29 : f32 to vector<8x256xf32>
    %103 = arith.addf %102, %101 : vector<8x256xf32>
    %104 = arith.divf %102, %103 : vector<8x256xf32>
    %105 = vector.extract_strided_slice %104 {offsets = [0, 0], sizes = [8, 64], strides = [1, 1]} : vector<8x256xf32> to vector<8x64xf32>
    %106 = vector.extract_strided_slice %104 {offsets = [0, 64], sizes = [8, 64], strides = [1, 1]} : vector<8x256xf32> to vector<8x64xf32>
    %107 = vector.extract_strided_slice %104 {offsets = [0, 192], sizes = [8, 64], strides = [1, 1]} : vector<8x256xf32> to vector<8x64xf32>
    %108 = vector.extract_strided_slice %99 {offsets = [0, 128], sizes = [8, 64], strides = [1, 1]} : vector<8x256xf32> to vector<8x64xf32>
    %109 = math.tanh %108 : vector<8x64xf32>
    %110 = arith.mulf %106, %91 : vector<8x64xf32>
    %111 = arith.mulf %105, %109 : vector<8x64xf32>
    %112 = arith.addf %110, %111 : vector<8x64xf32>
    %113 = math.tanh %112 : vector<8x64xf32>
    %114 = arith.mulf %107, %113 : vector<8x64xf32>
    %c5_i32 = arith.constant 5 : i32
    %c8_i32_30 = arith.constant 8 : i32
    %115 = arith.muli %c5_i32, %c8_i32_30 : i32
    %116 = tpu.assume_multiple %115, 8 : i32
    %117 = arith.index_cast %116 : i32 to index
    %c0_31 = arith.constant 0 : index
    %118 = vector.load %arg7[%117, %c0_31] : memref<64x256xf32, #tpu.memory_space<vmem>>, vector<8x256xf32>
    %cst_32 = arith.constant dense<0.000000e+00> : vector<8x256xf32>
    %119 = tpu.matmul %114, %7, %cst_32 {dimension_numbers = #tpu.dot_dimension_numbers<[1], [0], [0], [1], [0, 0, 1, 1], [], []>} : vector<8x64xf32>, vector<64x256xf32>, vector<8x256xf32> -> vector<8x256xf32>
    %120 = arith.addf %118, %119 : vector<8x256xf32>
    %121 = arith.negf %120 : vector<8x256xf32>
    %122 = math.exp %121 : vector<8x256xf32>
    %cst_33 = arith.constant 1.000000e+00 : f32
    %123 = vector.broadcast %cst_33 : f32 to vector<8x256xf32>
    %124 = arith.addf %123, %122 : vector<8x256xf32>
    %125 = arith.divf %123, %124 : vector<8x256xf32>
    %126 = vector.extract_strided_slice %125 {offsets = [0, 0], sizes = [8, 64], strides = [1, 1]} : vector<8x256xf32> to vector<8x64xf32>
    %127 = vector.extract_strided_slice %125 {offsets = [0, 64], sizes = [8, 64], strides = [1, 1]} : vector<8x256xf32> to vector<8x64xf32>
    %128 = vector.extract_strided_slice %125 {offsets = [0, 192], sizes = [8, 64], strides = [1, 1]} : vector<8x256xf32> to vector<8x64xf32>
    %129 = vector.extract_strided_slice %120 {offsets = [0, 128], sizes = [8, 64], strides = [1, 1]} : vector<8x256xf32> to vector<8x64xf32>
    %130 = math.tanh %129 : vector<8x64xf32>
    %131 = arith.mulf %127, %112 : vector<8x64xf32>
    %132 = arith.mulf %126, %130 : vector<8x64xf32>
    %133 = arith.addf %131, %132 : vector<8x64xf32>
    %134 = math.tanh %133 : vector<8x64xf32>
    %135 = arith.mulf %128, %134 : vector<8x64xf32>
    %c6_i32 = arith.constant 6 : i32
    %c8_i32_34 = arith.constant 8 : i32
    %136 = arith.muli %c6_i32, %c8_i32_34 : i32
    %137 = tpu.assume_multiple %136, 8 : i32
    %138 = arith.index_cast %137 : i32 to index
    %c0_35 = arith.constant 0 : index
    %139 = vector.load %arg7[%138, %c0_35] : memref<64x256xf32, #tpu.memory_space<vmem>>, vector<8x256xf32>
    %cst_36 = arith.constant dense<0.000000e+00> : vector<8x256xf32>
    %140 = tpu.matmul %135, %7, %cst_36 {dimension_numbers = #tpu.dot_dimension_numbers<[1], [0], [0], [1], [0, 0, 1, 1], [], []>} : vector<8x64xf32>, vector<64x256xf32>, vector<8x256xf32> -> vector<8x256xf32>
    %141 = arith.addf %139, %140 : vector<8x256xf32>
    %142 = arith.negf %141 : vector<8x256xf32>
    %143 = math.exp %142 : vector<8x256xf32>
    %cst_37 = arith.constant 1.000000e+00 : f32
    %144 = vector.broadcast %cst_37 : f32 to vector<8x256xf32>
    %145 = arith.addf %144, %143 : vector<8x256xf32>
    %146 = arith.divf %144, %145 : vector<8x256xf32>
    %147 = vector.extract_strided_slice %146 {offsets = [0, 0], sizes = [8, 64], strides = [1, 1]} : vector<8x256xf32> to vector<8x64xf32>
    %148 = vector.extract_strided_slice %146 {offsets = [0, 64], sizes = [8, 64], strides = [1, 1]} : vector<8x256xf32> to vector<8x64xf32>
    %149 = vector.extract_strided_slice %146 {offsets = [0, 192], sizes = [8, 64], strides = [1, 1]} : vector<8x256xf32> to vector<8x64xf32>
    %150 = vector.extract_strided_slice %141 {offsets = [0, 128], sizes = [8, 64], strides = [1, 1]} : vector<8x256xf32> to vector<8x64xf32>
    %151 = math.tanh %150 : vector<8x64xf32>
    %152 = arith.mulf %148, %133 : vector<8x64xf32>
    %153 = arith.mulf %147, %151 : vector<8x64xf32>
    %154 = arith.addf %152, %153 : vector<8x64xf32>
    %155 = math.tanh %154 : vector<8x64xf32>
    %156 = arith.mulf %149, %155 : vector<8x64xf32>
    %c7_i32 = arith.constant 7 : i32
    %c8_i32_38 = arith.constant 8 : i32
    %157 = arith.muli %c7_i32, %c8_i32_38 : i32
    %158 = tpu.assume_multiple %157, 8 : i32
    %159 = arith.index_cast %158 : i32 to index
    %c0_39 = arith.constant 0 : index
    %160 = vector.load %arg7[%159, %c0_39] : memref<64x256xf32, #tpu.memory_space<vmem>>, vector<8x256xf32>
    %cst_40 = arith.constant dense<0.000000e+00> : vector<8x256xf32>
    %161 = tpu.matmul %156, %7, %cst_40 {dimension_numbers = #tpu.dot_dimension_numbers<[1], [0], [0], [1], [0, 0, 1, 1], [], []>} : vector<8x64xf32>, vector<64x256xf32>, vector<8x256xf32> -> vector<8x256xf32>
    %162 = arith.addf %160, %161 : vector<8x256xf32>
    %163 = arith.negf %162 : vector<8x256xf32>
    %164 = math.exp %163 : vector<8x256xf32>
    %cst_41 = arith.constant 1.000000e+00 : f32
    %165 = vector.broadcast %cst_41 : f32 to vector<8x256xf32>
    %166 = arith.addf %165, %164 : vector<8x256xf32>
    %167 = arith.divf %165, %166 : vector<8x256xf32>
    %168 = vector.extract_strided_slice %167 {offsets = [0, 0], sizes = [8, 64], strides = [1, 1]} : vector<8x256xf32> to vector<8x64xf32>
    %169 = vector.extract_strided_slice %167 {offsets = [0, 64], sizes = [8, 64], strides = [1, 1]} : vector<8x256xf32> to vector<8x64xf32>
    %170 = vector.extract_strided_slice %167 {offsets = [0, 192], sizes = [8, 64], strides = [1, 1]} : vector<8x256xf32> to vector<8x64xf32>
    %171 = vector.extract_strided_slice %162 {offsets = [0, 128], sizes = [8, 64], strides = [1, 1]} : vector<8x256xf32> to vector<8x64xf32>
    %172 = math.tanh %171 : vector<8x64xf32>
    %173 = arith.mulf %169, %154 : vector<8x64xf32>
    %174 = arith.mulf %168, %172 : vector<8x64xf32>
    %175 = arith.addf %173, %174 : vector<8x64xf32>
    %176 = math.tanh %175 : vector<8x64xf32>
    %177 = arith.mulf %170, %176 : vector<8x64xf32>
    %c8_i32_42 = arith.constant 8 : i32
    %c0_43 = arith.constant 0 : index
    %c0_44 = arith.constant 0 : index
    %178 = vector.load %arg4[%c0_43, %c0_44] : memref<1x64xf32, #tpu.memory_space<vmem>>, vector<1x64xf32>
    %179 = vector.broadcast %178 : vector<1x64xf32> to vector<8x64xf32>
    %180 = arith.mulf %177, %179 : vector<8x64xf32>
    %cst_45 = arith.constant dense<0.000000e+00> : vector<8xf32>
    %181 = vector.multi_reduction <add>, %180, %cst_45 [1] : vector<8x64xf32> to vector<8xf32>
    %182 = vector.shape_cast %181 : vector<8xf32> to vector<8x1xf32>
    %c0_46 = arith.constant 0 : index
    %c0_47 = arith.constant 0 : index
    %183 = vector.load %arg5[%c0_46, %c0_47] : memref<1x1xf32, #tpu.memory_space<vmem>>, vector<1x1xf32>
    %184 = vector.broadcast %183 : vector<1x1xf32> to vector<8x1xf32>
    %185 = arith.addf %182, %184 : vector<8x1xf32>
    %c0_48 = arith.constant 0 : index
    %c0_49 = arith.constant 0 : index
    %186 = vector.load %arg6[%c0_48, %c0_49] : memref<8x1xf32, #tpu.memory_space<vmem>>, vector<8x1xf32>
    tpu.vector_store %arg6[%c0_48, %c0_49], %185 {strides = array<i32>} : memref<8x1xf32, #tpu.memory_space<vmem>>, vector<8x1xf32>,
    return
  }
}

</mosaic_0001>

<llo_original>
// kernel: tpu_custom_call.1
$region0: #{tpu_custom_call.1}
  #allocation0 [shape = 'u32[]', space=smem, size = 0x4, offset = 0x4, fixed_abs, tag = 'smem constant byte address 0x4 - core index']
  #allocation1 [shape = 'u32[144,128]{1,0:T(1,128)}', space=vmem, size = 0x12000, scoped, tag = 'internal scratch']
  #allocation2 [shape = 'f32[64,256]{1,0:T(8,128)}', space=vmem, size = 0x10000, scoped, tag = 'scratch operand']
  #allocation3 [shape = 'f32[1,1]{1,0:T(1,128)S(1)}', space=vmem, size = 0x200, scoped, tag = 'scoped memory for tpu_custom_call.1']
  %s0 = inlined_call_operand.vmem [shape: f32[64,5], index: 0, kind: input, shape index: {}]
  %s1 = inlined_call_operand.vmem [shape: f32[5,256], index: 1, kind: input, shape index: {}]
  %s2 = inlined_call_operand.hbm [shape: f32[64,256], index: 2, kind: input, shape index: {}]
  %s3 = inlined_call_operand.vmem [shape: f32[1,256], index: 3, kind: input, shape index: {}]
  %s4 = inlined_call_operand.vmem [shape: f32[1,64], index: 4, kind: input, shape index: {}]
  %s5 = inlined_call_operand.<no memory space> [shape: f32[1,1], index: 5, kind: input, shape index: {}]
  %s6 = inlined_call_operand.vmem [shape: f32[8,1], index: 6, kind: output, shape index: {}]
  %s7 = sld [smem:[#allocation0]]
  $region38: #{tpu_custom_call.1} parent=0
    _
  %s9 = ssub.s32 1, %s7
  %s10 = scalar_select 0, %s9, %s7
  %v11 = vstv %s5
  %12 = vst [vmem:[#allocation3] sm:$0x1] %v11
  $region1: #{tpu_custom_call.1} parent=0
    #allocation4 [shape = 'u8[65536]{0}', space=vmem, size = 0x10000, scoped, tag = 'input window, operand 2, single buffered']
    #allocation5 [shape = 's32[1]{0}', space=sflag, size = 0x4, scoped, tag = 'scoped memory for tpu_custom_call.1']
    %13 = vsyncpa [#allocation5], 0
    // Predicated region
    $region2: #{tpu_custom_call.1} parent=1 // pred_check
      _
    $region3: #{tpu_custom_call.1} parent=1 // pred_check_branch
      %15 = sbr.rel (0) target = $region5
    $region4: #{tpu_custom_call.1} parent=1 // pred_region
      _
    $region5: #{tpu_custom_call.1} parent=1 // pred_fallthru
      _
    // Predicated region
    $region6: #{tpu_custom_call.1} parent=1 // pred_check
      _
    $region7: #{tpu_custom_call.1} parent=1 // pred_check_branch
      %17 = sbr.rel (0) target = $region9
    $region8: #{tpu_custom_call.1} parent=1 // pred_region
      _
    $region9: #{tpu_custom_call.1} parent=1 // pred_fallthru
      _
    // Predicated region
    $region10: #{tpu_custom_call.1} parent=1 // pred_check
      _
    $region11: #{tpu_custom_call.1} parent=1 // pred_check_branch
      %19 = sbr.rel (0) target = $region13
    $region12: #{tpu_custom_call.1} parent=1 // pred_region
      %s21 = ssub.s32 2048, 2048
      %22 = vsyncadd [#allocation5], %s21
      %s23 = sshll.u32 [#allocation4], 4
      %s24 = int_to_ptr.vmem [resolvable:$true] %s23
      %29 = dma.hbm_to_vmem [thread:$0]  %s2, 2048, %s24, [#allocation5], 256, 256, 16
    $region13: #{tpu_custom_call.1} parent=1 // pred_fallthru
      _
    // Predicated region
    $region14: #{tpu_custom_call.1} parent=1 // pred_check
      _
    $region15: #{tpu_custom_call.1} parent=1 // pred_check_branch
      %31 = sbr.rel (0) target = $region17
    $region16: #{tpu_custom_call.1} parent=1 // pred_region
      _
    $region17: #{tpu_custom_call.1} parent=1 // pred_fallthru
      _
    // Predicated region
    $region18: #{tpu_custom_call.1} parent=1 // pred_check
      _
    $region19: #{tpu_custom_call.1} parent=1 // pred_check_branch
      %33 = sbr.rel (0) target = $region21
    $region20: #{tpu_custom_call.1} parent=1 // pred_region
      _
    $region21: #{tpu_custom_call.1} parent=1 // pred_fallthru
      _
    // Predicated region
    $region22: #{tpu_custom_call.1} parent=1 // pred_check
      _
    $region23: #{tpu_custom_call.1} parent=1 // pred_check_branch
      %35 = sbr.rel (0) target = $region25
    $region24: #{tpu_custom_call.1} parent=1 // pred_region
      _
    $region25: #{tpu_custom_call.1} parent=1 // pred_fallthru
      _
    // Predicated region
    $region26: #{tpu_custom_call.1} parent=1 // pred_check
      _
    $region27: #{tpu_custom_call.1} parent=1 // pred_check_branch
      %37 = sbr.rel (0) target = $region29
    $region28: #{tpu_custom_call.1} parent=1 // pred_region
      %38 = dma.done [#allocation5], 2048
    $region29: #{tpu_custom_call.1} parent=1 // pred_fallthru
      _
    %v39 = vld [vmem:[%s0] sm:$0xff]
    %v40 = vld [vmem:[%s0 + $0x8] sm:$0xff]
    %v41 = vld [vmem:[%s0 + $0x10] sm:$0xff]
    %v42 = vld [vmem:[%s0 + $0x18] sm:$0xff]
    %v43 = vld [vmem:[%s0 + $0x20] sm:$0xff]
    %v44 = vld [vmem:[%s0 + $0x28] sm:$0xff]
    %v45 = vld [vmem:[%s0 + $0x30] sm:$0xff]
    %v46 = vld [vmem:[%s0 + $0x38] sm:$0xff]
    %v47 = vld [vmem:[%s1] sm:$0x1f]
    %v48 = vld [vmem:[%s1 + $0x8] sm:$0x1f]
    %v49 = vld [vmem:[%s3] sm:$0x3]
    %v51 = vlaneseq
    %v52 = vshrl.u32 %v51, 7
    %v53 = vsub.s32 0, %v52
    %v54 = vrot.slane %v49, %v53
    %v55 = vlaneseq
    %v56 = vshrl.u32 %v55, 7
    %v57 = vsub.s32 1, %v56
    %v58 = vrot.slane %v49, %v57
    %vm61 = vcmask 39936
    %v63 = vsel %vm61, %v39, 0
    %v66 = vsel %vm61, %v40, 0
    %v69 = vsel %vm61, %v41, 0
    %v72 = vsel %vm61, %v42, 0
    %v75 = vsel %vm61, %v43, 0
    %v78 = vsel %vm61, %v44, 0
    %v81 = vsel %vm61, %v45, 0
    %v84 = vsel %vm61, %v46, 0
    %vm86 = vcmask 1044480
    %v88 = vsel %vm86, %v47, 0
    %v91 = vsel %vm86, %v48, 0
    %93 = vmatprep.subr.mxu0 %v91
    %94 = vmatpush1.msra.mxu0 %v88
    %95 = vmatprep.subr.mxu0 0.0
    %96 = vmatpush1.msra.mxu0 0.0
    %97 = vmatprep.subr.mxu0 0.0
    %98 = vmatpush1.msra.mxu0 0.0
    %99 = vmatprep.subr.mxu0 0.0
    %100 = vmatpush1.msra.mxu0 0.0
    %101 = vmatprep.subr.mxu0 0.0
    %102 = vmatpush1.msra.mxu0 0.0
    %103 = vmatprep.subr.mxu0 0.0
    %104 = vmatpush1.msra.mxu0 0.0
    %105 = vmatprep.subr.mxu0 0.0
    %106 = vmatpush1.msra.mxu0 0.0
    %107 = vmatprep.subr.mxu0 0.0
    %108 = vmatpush1.msra.mxu0 0.0
    %109 = vmatprep.subr.mxu0 0.0
    %110 = vmatpush1.msra.mxu0 0.0
    %111 = vmatprep.subr.mxu0 0.0
    %112 = vmatpush1.msra.mxu0 0.0
    %113 = vmatprep.subr.mxu0 0.0
    %114 = vmatpush1.msra.mxu0 0.0
    %115 = vmatprep.subr.mxu0 0.0
    %116 = vmatpush1.msra.mxu0 0.0
    %117 = vmatprep.subr.mxu0 0.0
    %118 = vmatpush1.msra.mxu0 0.0
    %119 = vmatprep.subr.mxu0 0.0
    %120 = vmatpush1.msra.mxu0 0.0
    %121 = vmatprep.subr.mxu0 0.0
    %122 = vmatpush1.msra.mxu0 0.0
    %123 = vmatprep.subr.mxu0 0.0
    %124 = vmatpush1.msra.mxu0 0.0
    %125 = vmatprep.subr.mxu0 0.0
    %126 = vmatpush1.msra.mxu0 0.0
    %127 = vmatprep.subr.mxu0 0.0
    %128 = vmatpush1.msra.mxu0 0.0
    %129 = vmatprep.subr.mxu0 0.0
    %130 = vmatpush1.msra.mxu0 0.0
    %131 = vmatprep.subr.mxu0 0.0
    %132 = vmatpush1.msra.mxu0 0.0
    %133 = vmatprep.subr.mxu0 0.0
    %134 = vmatpush1.msra.mxu0 0.0
    %135 = vmatprep.subr.mxu0 0.0
    %136 = vmatpush1.msra.mxu0 0.0
    %137 = vmatprep.subr.mxu0 0.0
    %138 = vmatpush1.msra.mxu0 0.0
    %139 = vmatprep.subr.mxu0 0.0
    %140 = vmatpush1.msra.mxu0 0.0
    %141 = vmatprep.subr.mxu0 0.0
    %142 = vmatpush1.msra.mxu0 0.0
    %143 = vmatprep.subr.mxu0 0.0
    %144 = vmatpush1.msra.mxu0 0.0
    %145 = vmatprep.subr.mxu0 0.0
    %146 = vmatpush1.msra.mxu0 0.0
    %147 = vmatprep.subr.mxu0 0.0
    %148 = vmatpush1.msra.mxu0 0.0
    %149 = vmatprep.subr.mxu0 0.0
    %150 = vmatpush1.msra.mxu0 0.0
    %151 = vmatprep.subr.mxu0 0.0
    %152 = vmatpush1.msra.mxu0 0.0
    %153 = vmatprep.subr.mxu0 0.0
    %154 = vmatpush1.msra.mxu0 0.0
    %155 = vmatprep.subr.mxu0 0.0
    %156 = vmatpush1.msra.mxu0 0.0
    %157 = vmatprep.mubr.f32.mxu0 0.0
    %158 = vmatmul.mubr.f32.gmra.mrb[0].mxu0 %v63
    %v159 = vpop.f32.mrb[0].mxu0
    %v160 = vadd.f32 %v54, %v159
    %v161 = vpop.f32.mrb[0].mxu0
    %v162 = vadd.f32 %v58, %v161
    %163 = vmatprep.mubr.f32.mxu0 0.0
    %164 = vmatmul.mubr.f32.gmra.mrb[0].mxu0 %v66
    %v165 = vpop.f32.mrb[0].mxu0
    %v166 = vadd.f32 %v54, %v165
    %v167 = vpop.f32.mrb[0].mxu0
    %v168 = vadd.f32 %v58, %v167
    %169 = vmatprep.mubr.f32.mxu0 0.0
    %170 = vmatmul.mubr.f32.gmra.mrb[0].mxu0 %v69
    %v171 = vpop.f32.mrb[0].mxu0
    %v172 = vadd.f32 %v54, %v171
    %v173 = vpop.f32.mrb[0].mxu0
    %v174 = vadd.f32 %v58, %v173
    %175 = vmatprep.mubr.f32.mxu0 0.0
    %176 = vmatmul.mubr.f32.gmra.mrb[0].mxu0 %v72
    %v177 = vpop.f32.mrb[0].mxu0
    %v178 = vadd.f32 %v54, %v177
    %v179 = vpop.f32.mrb[0].mxu0
    %v180 = vadd.f32 %v58, %v179
    %181 = vmatprep.mubr.f32.mxu0 0.0
    %182 = vmatmul.mubr.f32.gmra.mrb[0].mxu0 %v75
    %v183 = vpop.f32.mrb[0].mxu0
    %v184 = vadd.f32 %v54, %v183
    %v185 = vpop.f32.mrb[0].mxu0
    %v186 = vadd.f32 %v58, %v185
    %187 = vmatprep.mubr.f32.mxu0 0.0
    %188 = vmatmul.mubr.f32.gmra.mrb[0].mxu0 %v78
    %v189 = vpop.f32.mrb[0].mxu0
    %v190 = vadd.f32 %v54, %v189
    %v191 = vpop.f32.mrb[0].mxu0
    %v192 = vadd.f32 %v58, %v191
    %193 = vmatprep.mubr.f32.mxu0 0.0
    %194 = vmatmul.mubr.f32.gmra.mrb[0].mxu0 %v81
    %v195 = vpop.f32.mrb[0].mxu0
    %v196 = vadd.f32 %v54, %v195
    %v197 = vpop.f32.mrb[0].mxu0
    %v198 = vadd.f32 %v58, %v197
    %199 = vmatprep.mubr.f32.mxu0 0.0
    %200 = vmatmul.mubr.f32.gmra.mrb[0].mxu0 %v84
    %v201 = vpop.f32.mrb[0].mxu0
    %v202 = vadd.f32 %v54, %v201
    %v203 = vpop.f32.mrb[0].mxu0
    %v204 = vadd.f32 %v58, %v203
    %205 = vdwg.mxu0
    %206 = vst [vmem:[#allocation2] sm:$0xff] %v160
    %207 = vst [vmem:[#allocation2 + $0x8] sm:$0xff] %v162
    %208 = vst [vmem:[#allocation2 + $0x10] sm:$0xff] %v166
    %209 = vst [vmem:[#allocation2 + $0x18] sm:$0xff] %v168
    %210 = vst [vmem:[#allocation2 + $0x20] sm:$0xff] %v172
    %211 = vst [vmem:[#allocation2 + $0x28] sm:$0xff] %v174
    %212 = vst [vmem:[#allocation2 + $0x30] sm:$0xff] %v178
    %213 = vst [vmem:[#allocation2 + $0x38] sm:$0xff] %v180
    %214 = vst [vmem:[#allocation2 + $0x40] sm:$0xff] %v184
    %215 = vst [vmem:[#allocation2 + $0x48] sm:$0xff] %v186
    %216 = vst [vmem:[#allocation2 + $0x50] sm:$0xff] %v190
    %217 = vst [vmem:[#allocation2 + $0x58] sm:$0xff] %v192
    %218 = vst [vmem:[#allocation2 + $0x60] sm:$0xff] %v196
    %219 = vst [vmem:[#allocation2 + $0x68] sm:$0xff] %v198
    %220 = vst [vmem:[#allocation2 + $0x70] sm:$0xff] %v202
    %221 = vst [vmem:[#allocation2 + $0x78] sm:$0xff] %v204
    %v222 = vld [vmem:[#allocation4] sm:$0xff]
    %v223 = vld [vmem:[#allocation4 + $0x8] sm:$0xff]
    %v224 = vld [vmem:[#allocation4 + $0x10] sm:$0xff]
    %v225 = vld [vmem:[#allocation4 + $0x18] sm:$0xff]
    %v226 = vld [vmem:[#allocation4 + $0x20] sm:$0xff]
    %v227 = vld [vmem:[#allocation4 + $0x28] sm:$0xff]
    %v228 = vld [vmem:[#allocation4 + $0x30] sm:$0xff]
    %v229 = vld [vmem:[#allocation4 + $0x38] sm:$0xff]
    %v230 = vld [vmem:[#allocation4 + $0x40] sm:$0xff]
    %v231 = vld [vmem:[#allocation4 + $0x48] sm:$0xff]
    %v232 = vld [vmem:[#allocation4 + $0x50] sm:$0xff]
    %v233 = vld [vmem:[#allocation4 + $0x58] sm:$0xff]
    %v234 = vld [vmem:[#allocation4 + $0x60] sm:$0xff]
    %v235 = vld [vmem:[#allocation4 + $0x68] sm:$0xff]
    %v236 = vld [vmem:[#allocation4 + $0x70] sm:$0xff]
    %v237 = vld [vmem:[#allocation4 + $0x78] sm:$0xff]
    %s238 = smul.u32 0, 2
    %s239 = smul.addr %s238, 8
    %s240 = scalar_lea.vmem [#allocation2], %s239
    %v241 = vld [vmem:[%s240] sm:$0xff]
    %v242 = vld [vmem:[%s240 + $0x8] sm:$0xff]
    %vm243 = vcmask 523264
    %v245 = vsel %vm243, 0.0, 0
    %247 = vmatprep.subr.mxu0 %v223
    %248 = vmatpush1.msra.mxu0 %v222
    %249 = vmatprep.subr.mxu0 %v225
    %250 = vmatpush1.msra.mxu0 %v224
    %251 = vmatprep.subr.mxu0 %v227
    %252 = vmatpush1.msra.mxu0 %v226
    %253 = vmatprep.subr.mxu0 %v229
    %254 = vmatpush1.msra.mxu0 %v228
    %255 = vmatprep.subr.mxu0 %v231
    %256 = vmatpush1.msra.mxu0 %v230
    %257 = vmatprep.subr.mxu0 %v233
    %258 = vmatpush1.msra.mxu0 %v232
    %259 = vmatprep.subr.mxu0 %v235
    %260 = vmatpush1.msra.mxu0 %v234
    %261 = vmatprep.subr.mxu0 %v237
    %262 = vmatpush1.msra.mxu0 %v236
    %263 = vmatprep.subr.mxu0 0.0
    %264 = vmatpush1.msra.mxu0 0.0
    %265 = vmatprep.subr.mxu0 0.0
    %266 = vmatpush1.msra.mxu0 0.0
    %267 = vmatprep.subr.mxu0 0.0
    %268 = vmatpush1.msra.mxu0 0.0
    %269 = vmatprep.subr.mxu0 0.0
    %270 = vmatpush1.msra.mxu0 0.0
    %271 = vmatprep.subr.mxu0 0.0
    %272 = vmatpush1.msra.mxu0 0.0
    %273 = vmatprep.subr.mxu0 0.0
    %274 = vmatpush1.msra.mxu0 0.0
    %275 = vmatprep.subr.mxu0 0.0
    %276 = vmatpush1.msra.mxu0 0.0
    %277 = vmatprep.subr.mxu0 0.0
    %278 = vmatpush1.msra.mxu0 0.0
    %279 = vmatprep.subr.mxu0 0.0
    %280 = vmatpush1.msra.mxu0 0.0
    %281 = vmatprep.subr.mxu0 0.0
    %282 = vmatpush1.msra.mxu0 0.0
    %283 = vmatprep.subr.mxu0 0.0
    %284 = vmatpush1.msra.mxu0 0.0
    %285 = vmatprep.subr.mxu0 0.0
    %286 = vmatpush1.msra.mxu0 0.0
    %287 = vmatprep.subr.mxu0 0.0
    %288 = vmatpush1.msra.mxu0 0.0
    %289 = vmatprep.subr.mxu0 0.0
    %290 = vmatpush1.msra.mxu0 0.0
    %291 = vmatprep.subr.mxu0 0.0
    %292 = vmatpush1.msra.mxu0 0.0
    %293 = vmatprep.subr.mxu0 0.0
    %294 = vmatpush1.msra.mxu0 0.0
    %295 = vmatprep.subr.mxu0 0.0
    %296 = vmatpush1.msra.mxu0 0.0
    %297 = vmatprep.subr.mxu0 0.0
    %298 = vmatpush1.msra.mxu0 0.0
    %299 = vmatprep.subr.mxu0 0.0
    %300 = vmatpush1.msra.mxu0 0.0
    %301 = vmatprep.subr.mxu0 0.0
    %302 = vmatpush1.msra.mxu0 0.0
    %303 = vmatprep.subr.mxu0 0.0
    %304 = vmatpush1.msra.mxu0 0.0
    %305 = vmatprep.subr.mxu0 0.0
    %306 = vmatpush1.msra.mxu0 0.0
    %307 = vmatprep.subr.mxu0 0.0
    %308 = vmatpush1.msra.mxu0 0.0
    %309 = vmatprep.subr.mxu0 0.0
    %310 = vmatpush1.msra.mxu0 0.0
    %311 = vmatprep.mubr.f32.mxu0 0.0
    %312 = vmatmul.mubr.f32.gmra.mrb[0].mxu0 %v245
    %v313 = vpop.f32.mrb[0].mxu0
    %v314 = vadd.f32 0.0, %v313
    %v315 = vpop.f32.mrb[0].mxu0
    %v316 = vadd.f32 0.0, %v315
    %317 = vdwg.mxu0
    %v318 = vadd.f32 %v241, %v314
    %v319 = vadd.f32 %v242, %v316
    %v320 = vxor.u32 %v318, 2147483648
    %v321 = vxor.u32 %v319, 2147483648
    %v322 = vmul.f32 %v320, 1.442695
    %v323 = vpow.pop %v322
    %v324 = vmul.f32 %v321, 1.442695
    %v325 = vpow.pop %v324
    %v326 = vadd.f32 %v323, 1.0
    %v327 = vadd.f32 %v325, 1.0
    %v328 = vrcp.pop %v326
    %v329 = vmul.f32 1.0, %v328
    %v330 = vrcp.pop %v327
    %v331 = vmul.f32 1.0, %v330
    %v332 = vtanh.pop %v319
    %v333 = vmul.f32 %v329, 0.0
    %v334 = vmul.f32 %v329, %v332
    %336 = vrot.lane.b32.xlu0 %v334, 64
    %v337 = vpop.permute.xlu0 %336
    %v339 = vadd.f32 %v333, %v337
    %v340 = vtanh.pop %v339
    %v341 = vmul.f32 %v331, %v340
    %s342 = smul.u32 1, 2
    %s343 = smul.addr %s342, 8
    %s344 = scalar_lea.vmem [#allocation2], %s343
    %v345 = vld [vmem:[%s344] sm:$0xff]
    %v346 = vld [vmem:[%s344 + $0x8] sm:$0xff]
    %348 = vrot.lane.b32.xlu0 %v341, 64
    %v349 = vpop.permute.xlu0 %348
    %v350 = vsel %vm243, %v349, 0
    %352 = vmatprep.subr.mxu0 %v223
    %353 = vmatpush1.msra.mxu0 %v222
    %354 = vmatprep.subr.mxu0 %v225
    %355 = vmatpush1.msra.mxu0 %v224
    %356 = vmatprep.subr.mxu0 %v227
    %357 = vmatpush1.msra.mxu0 %v226
    %358 = vmatprep.subr.mxu0 %v229
    %359 = vmatpush1.msra.mxu0 %v228
    %360 = vmatprep.subr.mxu0 %v231
    %361 = vmatpush1.msra.mxu0 %v230
    %362 = vmatprep.subr.mxu0 %v233
    %363 = vmatpush1.msra.mxu0 %v232
    %364 = vmatprep.subr.mxu0 %v235
    %365 = vmatpush1.msra.mxu0 %v234
    %366 = vmatprep.subr.mxu0 %v237
    %367 = vmatpush1.msra.mxu0 %v236
    %368 = vmatprep.subr.mxu0 0.0
    %369 = vmatpush1.msra.mxu0 0.0
    %370 = vmatprep.subr.mxu0 0.0
    %371 = vmatpush1.msra.mxu0 0.0
    %372 = vmatprep.subr.mxu0 0.0
    %373 = vmatpush1.msra.mxu0 0.0
    %374 = vmatprep.subr.mxu0 0.0
    %375 = vmatpush1.msra.mxu0 0.0
    %376 = vmatprep.subr.mxu0 0.0
    %377 = vmatpush1.msra.mxu0 0.0
    %378 = vmatprep.subr.mxu0 0.0
    %379 = vmatpush1.msra.mxu0 0.0
    %380 = vmatprep.subr.mxu0 0.0
    %381 = vmatpush1.msra.mxu0 0.0
    %382 = vmatprep.subr.mxu0 0.0
    %383 = vmatpush1.msra.mxu0 0.0
    %384 = vmatprep.subr.mxu0 0.0
    %385 = vmatpush1.msra.mxu0 0.0
    %386 = vmatprep.subr.mxu0 0.0
    %387 = vmatpush1.msra.mxu0 0.0
    %388 = vmatprep.subr.mxu0 0.0
    %389 = vmatpush1.msra.mxu0 0.0
    %390 = vmatprep.subr.mxu0 0.0
    %391 = vmatpush1.msra.mxu0 0.0
    %392 = vmatprep.subr.mxu0 0.0
    %393 = vmatpush1.msra.mxu0 0.0
    %394 = vmatprep.subr.mxu0 0.0
    %395 = vmatpush1.msra.mxu0 0.0
    %396 = vmatprep.subr.mxu0 0.0
    %397 = vmatpush1.msra.mxu0 0.0
    %398 = vmatprep.subr.mxu0 0.0
    %399 = vmatpush1.msra.mxu0 0.0
    %400 = vmatprep.subr.mxu0 0.0
    %401 = vmatpush1.msra.mxu0 0.0
    %402 = vmatprep.subr.mxu0 0.0
    %403 = vmatpush1.msra.mxu0 0.0
    %404 = vmatprep.subr.mxu0 0.0
    %405 = vmatpush1.msra.mxu0 0.0
    %406 = vmatprep.subr.mxu0 0.0
    %407 = vmatpush1.msra.mxu0 0.0
    %408 = vmatprep.subr.mxu0 0.0
    %409 = vmatpush1.msra.mxu0 0.0
    %410 = vmatprep.subr.mxu0 0.0
    %411 = vmatpush1.msra.mxu0 0.0
    %412 = vmatprep.subr.mxu0 0.0
    %413 = vmatpush1.msra.mxu0 0.0
    %414 = vmatprep.subr.mxu0 0.0
    %415 = vmatpush1.msra.mxu0 0.0
    %416 = vmatprep.mubr.f32.mxu0 0.0
    %417 = vmatmul.mubr.f32.gmra.mrb[0].mxu0 %v350
    %v418 = vpop.f32.mrb[0].mxu0
    %v419 = vadd.f32 0.0, %v418
    %v420 = vpop.f32.mrb[0].mxu0
    %v421 = vadd.f32 0.0, %v420
    %422 = vdwg.mxu0
    %v423 = vadd.f32 %v345, %v419
    %v424 = vadd.f32 %v346, %v421
    %v425 = vxor.u32 %v423, 2147483648
    %v426 = vxor.u32 %v424, 2147483648
    %v427 = vmul.f32 %v425, 1.442695
    %v428 = vpow.pop %v427
    %v429 = vmul.f32 %v426, 1.442695
    %v430 = vpow.pop %v429
    %v431 = vadd.f32 %v428, 1.0
    %v432 = vadd.f32 %v430, 1.0
    %v433 = vrcp.pop %v431
    %v434 = vmul.f32 1.0, %v433
    %v435 = vrcp.pop %v432
    %v436 = vmul.f32 1.0, %v435
    %v437 = vtanh.pop %v424
    %v438 = vmul.f32 %v434, %v339
    %v439 = vmul.f32 %v434, %v437
    %441 = vrot.lane.b32.xlu0 %v439, 64
    %v442 = vpop.permute.xlu0 %441
    %v444 = vadd.f32 %v438, %v442
    %v445 = vtanh.pop %v444
    %v446 = vmul.f32 %v436, %v445
    %s447 = smul.u32 2, 2
    %s448 = smul.addr %s447, 8
    %s449 = scalar_lea.vmem [#allocation2], %s448
    %v450 = vld [vmem:[%s449] sm:$0xff]
    %v451 = vld [vmem:[%s449 + $0x8] sm:$0xff]
    %453 = vrot.lane.b32.xlu0 %v446, 64
    %v454 = vpop.permute.xlu0 %453
    %v455 = vsel %vm243, %v454, 0
    %457 = vmatprep.subr.mxu0 %v223
    %458 = vmatpush1.msra.mxu0 %v222
    %459 = vmatprep.subr.mxu0 %v225
    %460 = vmatpush1.msra.mxu0 %v224
    %461 = vmatprep.subr.mxu0 %v227
    %462 = vmatpush1.msra.mxu0 %v226
    %463 = vmatprep.subr.mxu0 %v229
    %464 = vmatpush1.msra.mxu0 %v228
    %465 = vmatprep.subr.mxu0 %v231
    %466 = vmatpush1.msra.mxu0 %v230
    %467 = vmatprep.subr.mxu0 %v233
    %468 = vmatpush1.msra.mxu0 %v232
    %469 = vmatprep.subr.mxu0 %v235
    %470 = vmatpush1.msra.mxu0 %v234
    %471 = vmatprep.subr.mxu0 %v237
    %472 = vmatpush1.msra.mxu0 %v236
    %473 = vmatprep.subr.mxu0 0.0
    %474 = vmatpush1.msra.mxu0 0.0
    %475 = vmatprep.subr.mxu0 0.0
    %476 = vmatpush1.msra.mxu0 0.0
    %477 = vmatprep.subr.mxu0 0.0
    %478 = vmatpush1.msra.mxu0 0.0
    %479 = vmatprep.subr.mxu0 0.0
    %480 = vmatpush1.msra.mxu0 0.0
    %481 = vmatprep.subr.mxu0 0.0
    %482 = vmatpush1.msra.mxu0 0.0
    %483 = vmatprep.subr.mxu0 0.0
    %484 = vmatpush1.msra.mxu0 0.0
    %485 = vmatprep.subr.mxu0 0.0
    %486 = vmatpush1.msra.mxu0 0.0
    %487 = vmatprep.subr.mxu0 0.0
    %488 = vmatpush1.msra.mxu0 0.0
    %489 = vmatprep.subr.mxu0 0.0
    %490 = vmatpush1.msra.mxu0 0.0
    %491 = vmatprep.subr.mxu0 0.0
    %492 = vmatpush1.msra.mxu0 0.0
    %493 = vmatprep.subr.mxu0 0.0
    %494 = vmatpush1.msra.mxu0 0.0
    %495 = vmatprep.subr.mxu0 0.0
    %496 = vmatpush1.msra.mxu0 0.0
    %497 = vmatprep.subr.mxu0 0.0
    %498 = vmatpush1.msra.mxu0 0.0
    %499 = vmatprep.subr.mxu0 0.0
    %500 = vmatpush1.msra.mxu0 0.0
    %501 = vmatprep.subr.mxu0 0.0
    %502 = vmatpush1.msra.mxu0 0.0
    %503 = vmatprep.subr.mxu0 0.0
    %504 = vmatpush1.msra.mxu0 0.0
    %505 = vmatprep.subr.mxu0 0.0
    %506 = vmatpush1.msra.mxu0 0.0
    %507 = vmatprep.subr.mxu0 0.0
    %508 = vmatpush1.msra.mxu0 0.0
    %509 = vmatprep.subr.mxu0 0.0
    %510 = vmatpush1.msra.mxu0 0.0
    %511 = vmatprep.subr.mxu0 0.0
    %512 = vmatpush1.msra.mxu0 0.0
    %513 = vmatprep.subr.mxu0 0.0
    %514 = vmatpush1.msra.mxu0 0.0
    %515 = vmatprep.subr.mxu0 0.0
    %516 = vmatpush1.msra.mxu0 0.0
    %517 = vmatprep.subr.mxu0 0.0
    %518 = vmatpush1.msra.mxu0 0.0
    %519 = vmatprep.subr.mxu0 0.0
    %520 = vmatpush1.msra.mxu0 0.0
    %521 = vmatprep.mubr.f32.mxu0 0.0
    %522 = vmatmul.mubr.f32.gmra.mrb[0].mxu0 %v455
    %v523 = vpop.f32.mrb[0].mxu0
    %v524 = vadd.f32 0.0, %v523
    %v525 = vpop.f32.mrb[0].mxu0
    %v526 = vadd.f32 0.0, %v525
    %527 = vdwg.mxu0
    %v528 = vadd.f32 %v450, %v524
    %v529 = vadd.f32 %v451, %v526
    %v530 = vxor.u32 %v528, 2147483648
    %v531 = vxor.u32 %v529, 2147483648
    %v532 = vmul.f32 %v530, 1.442695
    %v533 = vpow.pop %v532
    %v534 = vmul.f32 %v531, 1.442695
    %v535 = vpow.pop %v534
    %v536 = vadd.f32 %v533, 1.0
    %v537 = vadd.f32 %v535, 1.0
    %v538 = vrcp.pop %v536
    %v539 = vmul.f32 1.0, %v538
    %v540 = vrcp.pop %v537
    %v541 = vmul.f32 1.0, %v540
    %v542 = vtanh.pop %v529
    %v543 = vmul.f32 %v539, %v444
    %v544 = vmul.f32 %v539, %v542
    %546 = vrot.lane.b32.xlu0 %v544, 64
    %v547 = vpop.permute.xlu0 %546
    %v549 = vadd.f32 %v543, %v547
    %v550 = vtanh.pop %v549
    %v551 = vmul.f32 %v541, %v550
    %s552 = smul.u32 3, 2
    %s553 = smul.addr %s552, 8
    %s554 = scalar_lea.vmem [#allocation2], %s553
    %v555 = vld [vmem:[%s554] sm:$0xff]
    %v556 = vld [vmem:[%s554 + $0x8] sm:$0xff]
    %558 = vrot.lane.b32.xlu0 %v551, 64
    %v559 = vpop.permute.xlu0 %558
    %v560 = vsel %vm243, %v559, 0
    %562 = vmatprep.subr.mxu0 %v223
    %563 = vmatpush1.msra.mxu0 %v222
    %564 = vmatprep.subr.mxu0 %v225
    %565 = vmatpush1.msra.mxu0 %v224
    %566 = vmatprep.subr.mxu0 %v227
    %567 = vmatpush1.msra.mxu0 %v226
    %568 = vmatprep.subr.mxu0 %v229
    %569 = vmatpush1.msra.mxu0 %v228
    %570 = vmatprep.subr.mxu0 %v231
    %571 = vmatpush1.msra.mxu0 %v230
    %572 = vmatprep.subr.mxu0 %v233
    %573 = vmatpush1.msra.mxu0 %v232
    %574 = vmatprep.subr.mxu0 %v235
    %575 = vmatpush1.msra.mxu0 %v234
    %576 = vmatprep.subr.mxu0 %v237
    %577 = vmatpush1.msra.mxu0 %v236
    %578 = vmatprep.subr.mxu0 0.0
    %579 = vmatpush1.msra.mxu0 0.0
    %580 = vmatprep.subr.mxu0 0.0
    %581 = vmatpush1.msra.mxu0 0.0
    %582 = vmatprep.subr.mxu0 0.0
    %583 = vmatpush1.msra.mxu0 0.0
    %584 = vmatprep.subr.mxu0 0.0
    %585 = vmatpush1.msra.mxu0 0.0
    %586 = vmatprep.subr.mxu0 0.0
    %587 = vmatpush1.msra.mxu0 0.0
    %588 = vmatprep.subr.mxu0 0.0
    %589 = vmatpush1.msra.mxu0 0.0
    %590 = vmatprep.subr.mxu0 0.0
    %591 = vmatpush1.msra.mxu0 0.0
    %592 = vmatprep.subr.mxu0 0.0
    %593 = vmatpush1.msra.mxu0 0.0
    %594 = vmatprep.subr.mxu0 0.0
    %595 = vmatpush1.msra.mxu0 0.0
    %596 = vmatprep.subr.mxu0 0.0
    %597 = vmatpush1.msra.mxu0 0.0
    %598 = vmatprep.subr.mxu0 0.0
    %599 = vmatpush1.msra.mxu0 0.0
    %600 = vmatprep.subr.mxu0 0.0
    %601 = vmatpush1.msra.mxu0 0.0
    %602 = vmatprep.subr.mxu0 0.0
    %603 = vmatpush1.msra.mxu0 0.0
    %604 = vmatprep.subr.mxu0 0.0
    %605 = vmatpush1.msra.mxu0 0.0
    %606 = vmatprep.subr.mxu0 0.0
    %607 = vmatpush1.msra.mxu0 0.0
    %608 = vmatprep.subr.mxu0 0.0
    %609 = vmatpush1.msra.mxu0 0.0
    %610 = vmatprep.subr.mxu0 0.0
    %611 = vmatpush1.msra.mxu0 0.0
    %612 = vmatprep.subr.mxu0 0.0
    %613 = vmatpush1.msra.mxu0 0.0
    %614 = vmatprep.subr.mxu0 0.0
    %615 = vmatpush1.msra.mxu0 0.0
    %616 = vmatprep.subr.mxu0 0.0
    %617 = vmatpush1.msra.mxu0 0.0
    %618 = vmatprep.subr.mxu0 0.0
    %619 = vmatpush1.msra.mxu0 0.0
    %620 = vmatprep.subr.mxu0 0.0
    %621 = vmatpush1.msra.mxu0 0.0
    %622 = vmatprep.subr.mxu0 0.0
    %623 = vmatpush1.msra.mxu0 0.0
    %624 = vmatprep.subr.mxu0 0.0
    %625 = vmatpush1.msra.mxu0 0.0
    %626 = vmatprep.mubr.f32.mxu0 0.0
    %627 = vmatmul.mubr.f32.gmra.mrb[0].mxu0 %v560
    %v628 = vpop.f32.mrb[0].mxu0
    %v629 = vadd.f32 0.0, %v628
    %v630 = vpop.f32.mrb[0].mxu0
    %v631 = vadd.f32 0.0, %v630
    %632 = vdwg.mxu0
    %v633 = vadd.f32 %v555, %v629
    %v634 = vadd.f32 %v556, %v631
    %v635 = vxor.u32 %v633, 2147483648
    %v636 = vxor.u32 %v634, 2147483648
    %v637 = vmul.f32 %v635, 1.442695
    %v638 = vpow.pop %v637
    %v639 = vmul.f32 %v636, 1.442695
    %v640 = vpow.pop %v639
    %v641 = vadd.f32 %v638, 1.0
    %v642 = vadd.f32 %v640, 1.0
    %v643 = vrcp.pop %v641
    %v644 = vmul.f32 1.0, %v643
    %v645 = vrcp.pop %v642
    %v646 = vmul.f32 1.0, %v645
    %v647 = vtanh.pop %v634
    %v648 = vmul.f32 %v644, %v549
    %v649 = vmul.f32 %v644, %v647
    %651 = vrot.lane.b32.xlu0 %v649, 64
    %v652 = vpop.permute.xlu0 %651
    %v654 = vadd.f32 %v648, %v652
    %v655 = vtanh.pop %v654
    %v656 = vmul.f32 %v646, %v655
    %s657 = smul.u32 4, 2
    %s658 = smul.addr %s657, 8
    %s659 = scalar_lea.vmem [#allocation2], %s658
    %v660 = vld [vmem:[%s659] sm:$0xff]
    %v661 = vld [vmem:[%s659 + $0x8] sm:$0xff]
    %663 = vrot.lane.b32.xlu0 %v656, 64
    %v664 = vpop.permute.xlu0 %663
    %v665 = vsel %vm243, %v664, 0
    %667 = vmatprep.subr.mxu0 %v223
    %668 = vmatpush1.msra.mxu0 %v222
    %669 = vmatprep.subr.mxu0 %v225
    %670 = vmatpush1.msra.mxu0 %v224
    %671 = vmatprep.subr.mxu0 %v227
    %672 = vmatpush1.msra.mxu0 %v226
    %673 = vmatprep.subr.mxu0 %v229
    %674 = vmatpush1.msra.mxu0 %v228
    %675 = vmatprep.subr.mxu0 %v231
    %676 = vmatpush1.msra.mxu0 %v230
    %677 = vmatprep.subr.mxu0 %v233
    %678 = vmatpush1.msra.mxu0 %v232
    %679 = vmatprep.subr.mxu0 %v235
    %680 = vmatpush1.msra.mxu0 %v234
    %681 = vmatprep.subr.mxu0 %v237
    %682 = vmatpush1.msra.mxu0 %v236
    %683 = vmatprep.subr.mxu0 0.0
    %684 = vmatpush1.msra.mxu0 0.0
    %685 = vmatprep.subr.mxu0 0.0
    %686 = vmatpush1.msra.mxu0 0.0
    %687 = vmatprep.subr.mxu0 0.0
    %688 = vmatpush1.msra.mxu0 0.0
    %689 = vmatprep.subr.mxu0 0.0
    %690 = vmatpush1.msra.mxu0 0.0
    %691 = vmatprep.subr.mxu0 0.0
    %692 = vmatpush1.msra.mxu0 0.0
    %693 = vmatprep.subr.mxu0 0.0
    %694 = vmatpush1.msra.mxu0 0.0
    %695 = vmatprep.subr.mxu0 0.0
    %696 = vmatpush1.msra.mxu0 0.0
    %697 = vmatprep.subr.mxu0 0.0
    %698 = vmatpush1.msra.mxu0 0.0
    %699 = vmatprep.subr.mxu0 0.0
    %700 = vmatpush1.msra.mxu0 0.0
    %701 = vmatprep.subr.mxu0 0.0
    %702 = vmatpush1.msra.mxu0 0.0
    %703 = vmatprep.subr.mxu0 0.0
    %704 = vmatpush1.msra.mxu0 0.0
    %705 = vmatprep.subr.mxu0 0.0
    %706 = vmatpush1.msra.mxu0 0.0
    %707 = vmatprep.subr.mxu0 0.0
    %708 = vmatpush1.msra.mxu0 0.0
    %709 = vmatprep.subr.mxu0 0.0
    %710 = vmatpush1.msra.mxu0 0.0
    %711 = vmatprep.subr.mxu0 0.0
    %712 = vmatpush1.msra.mxu0 0.0
    %713 = vmatprep.subr.mxu0 0.0
    %714 = vmatpush1.msra.mxu0 0.0
    %715 = vmatprep.subr.mxu0 0.0
    %716 = vmatpush1.msra.mxu0 0.0
    %717 = vmatprep.subr.mxu0 0.0
    %718 = vmatpush1.msra.mxu0 0.0
    %719 = vmatprep.subr.mxu0 0.0
    %720 = vmatpush1.msra.mxu0 0.0
    %721 = vmatprep.subr.mxu0 0.0
    %722 = vmatpush1.msra.mxu0 0.0
    %723 = vmatprep.subr.mxu0 0.0
    %724 = vmatpush1.msra.mxu0 0.0
    %725 = vmatprep.subr.mxu0 0.0
    %726 = vmatpush1.msra.mxu0 0.0
    %727 = vmatprep.subr.mxu0 0.0
    %728 = vmatpush1.msra.mxu0 0.0
    %729 = vmatprep.subr.mxu0 0.0
    %730 = vmatpush1.msra.mxu0 0.0
    %731 = vmatprep.mubr.f32.mxu0 0.0
    %732 = vmatmul.mubr.f32.gmra.mrb[0].mxu0 %v665
    %v733 = vpop.f32.mrb[0].mxu0
    %v734 = vadd.f32 0.0, %v733
    %v735 = vpop.f32.mrb[0].mxu0
    %v736 = vadd.f32 0.0, %v735
    %737 = vdwg.mxu0
    %v738 = vadd.f32 %v660, %v734
    %v739 = vadd.f32 %v661, %v736
    %v740 = vxor.u32 %v738, 2147483648
    %v741 = vxor.u32 %v739, 2147483648
    %v742 = vmul.f32 %v740, 1.442695
    %v743 = vpow.pop %v742
    %v744 = vmul.f32 %v741, 1.442695
    %v745 = vpow.pop %v744
    %v746 = vadd.f32 %v743, 1.0
    %v747 = vadd.f32 %v745, 1.0
    %v748 = vrcp.pop %v746
    %v749 = vmul.f32 1.0, %v748
    %v750 = vrcp.pop %v747
    %v751 = vmul.f32 1.0, %v750
    %v752 = vtanh.pop %v739
    %v753 = vmul.f32 %v749, %v654
    %v754 = vmul.f32 %v749, %v752
    %756 = vrot.lane.b32.xlu0 %v754, 64
    %v757 = vpop.permute.xlu0 %756
    %v759 = vadd.f32 %v753, %v757
    %v760 = vtanh.pop %v759
    %v761 = vmul.f32 %v751, %v760
    %s762 = smul.u32 5, 2
    %s763 = smul.addr %s762, 8
    %s764 = scalar_lea.vmem [#allocation2], %s763
    %v765 = vld [vmem:[%s764] sm:$0xff]
    %v766 = vld [vmem:[%s764 + $0x8] sm:$0xff]
    %768 = vrot.lane.b32.xlu0 %v761, 64
    %v769 = vpop.permute.xlu0 %768
    %v770 = vsel %vm243, %v769, 0
    %772 = vmatprep.subr.mxu0 %v223
    %773 = vmatpush1.msra.mxu0 %v222
    %774 = vmatprep.subr.mxu0 %v225
    %775 = vmatpush1.msra.mxu0 %v224
    %776 = vmatprep.subr.mxu0 %v227
    %777 = vmatpush1.msra.mxu0 %v226
    %778 = vmatprep.subr.mxu0 %v229
    %779 = vmatpush1.msra.mxu0 %v228
    %780 = vmatprep.subr.mxu0 %v231
    %781 = vmatpush1.msra.mxu0 %v230
    %782 = vmatprep.subr.mxu0 %v233
    %783 = vmatpush1.msra.mxu0 %v232
    %784 = vmatprep.subr.mxu0 %v235
    %785 = vmatpush1.msra.mxu0 %v234
    %786 = vmatprep.subr.mxu0 %v237
    %787 = vmatpush1.msra.mxu0 %v236
    %788 = vmatprep.subr.mxu0 0.0
    %789 = vmatpush1.msra.mxu0 0.0
    %790 = vmatprep.subr.mxu0 0.0
    %791 = vmatpush1.msra.mxu0 0.0
    %792 = vmatprep.subr.mxu0 0.0
    %793 = vmatpush1.msra.mxu0 0.0
    %794 = vmatprep.subr.mxu0 0.0
    %795 = vmatpush1.msra.mxu0 0.0
    %796 = vmatprep.subr.mxu0 0.0
    %797 = vmatpush1.msra.mxu0 0.0
    %798 = vmatprep.subr.mxu0 0.0
    %799 = vmatpush1.msra.mxu0 0.0
    %800 = vmatprep.subr.mxu0 0.0
    %801 = vmatpush1.msra.mxu0 0.0
    %802 = vmatprep.subr.mxu0 0.0
    %803 = vmatpush1.msra.mxu0 0.0
    %804 = vmatprep.subr.mxu0 0.0
    %805 = vmatpush1.msra.mxu0 0.0
    %806 = vmatprep.subr.mxu0 0.0
    %807 = vmatpush1.msra.mxu0 0.0
    %808 = vmatprep.subr.mxu0 0.0
    %809 = vmatpush1.msra.mxu0 0.0
    %810 = vmatprep.subr.mxu0 0.0
    %811 = vmatpush1.msra.mxu0 0.0
    %812 = vmatprep.subr.mxu0 0.0
    %813 = vmatpush1.msra.mxu0 0.0
    %814 = vmatprep.subr.mxu0 0.0
    %815 = vmatpush1.msra.mxu0 0.0
    %816 = vmatprep.subr.mxu0 0.0
    %817 = vmatpush1.msra.mxu0 0.0
    %818 = vmatprep.subr.mxu0 0.0
    %819 = vmatpush1.msra.mxu0 0.0
    %820 = vmatprep.subr.mxu0 0.0
    %821 = vmatpush1.msra.mxu0 0.0
    %822 = vmatprep.subr.mxu0 0.0
    %823 = vmatpush1.msra.mxu0 0.0
    %824 = vmatprep.subr.mxu0 0.0
    %825 = vmatpush1.msra.mxu0 0.0
    %826 = vmatprep.subr.mxu0 0.0
    %827 = vmatpush1.msra.mxu0 0.0
    %828 = vmatprep.subr.mxu0 0.0
    %829 = vmatpush1.msra.mxu0 0.0
    %830 = vmatprep.subr.mxu0 0.0
    %831 = vmatpush1.msra.mxu0 0.0
    %832 = vmatprep.subr.mxu0 0.0
    %833 = vmatpush1.msra.mxu0 0.0
    %834 = vmatprep.subr.mxu0 0.0
    %835 = vmatpush1.msra.mxu0 0.0
    %836 = vmatprep.mubr.f32.mxu0 0.0
    %837 = vmatmul.mubr.f32.gmra.mrb[0].mxu0 %v770
    %v838 = vpop.f32.mrb[0].mxu0
    %v839 = vadd.f32 0.0, %v838
    %v840 = vpop.f32.mrb[0].mxu0
    %v841 = vadd.f32 0.0, %v840
    %842 = vdwg.mxu0
    %v843 = vadd.f32 %v765, %v839
    %v844 = vadd.f32 %v766, %v841
    %v845 = vxor.u32 %v843, 2147483648
    %v846 = vxor.u32 %v844, 2147483648
    %v847 = vmul.f32 %v845, 1.442695
    %v848 = vpow.pop %v847
    %v849 = vmul.f32 %v846, 1.442695
    %v850 = vpow.pop %v849
    %v851 = vadd.f32 %v848, 1.0
    %v852 = vadd.f32 %v850, 1.0
    %v853 = vrcp.pop %v851
    %v854 = vmul.f32 1.0, %v853
    %v855 = vrcp.pop %v852
    %v856 = vmul.f32 1.0, %v855
    %v857 = vtanh.pop %v844
    %v858 = vmul.f32 %v854, %v759
    %v859 = vmul.f32 %v854, %v857
    %861 = vrot.lane.b32.xlu0 %v859, 64
    %v862 = vpop.permute.xlu0 %861
    %v864 = vadd.f32 %v858, %v862
    %v865 = vtanh.pop %v864
    %v866 = vmul.f32 %v856, %v865
    %s867 = smul.u32 6, 2
    %s868 = smul.addr %s867, 8
    %s869 = scalar_lea.vmem [#allocation2], %s868
    %v870 = vld [vmem:[%s869] sm:$0xff]
    %v871 = vld [vmem:[%s869 + $0x8] sm:$0xff]
    %873 = vrot.lane.b32.xlu0 %v866, 64
    %v874 = vpop.permute.xlu0 %873
    %v875 = vsel %vm243, %v874, 0
    %877 = vmatprep.subr.mxu0 %v223
    %878 = vmatpush1.msra.mxu0 %v222
    %879 = vmatprep.subr.mxu0 %v225
    %880 = vmatpush1.msra.mxu0 %v224
    %881 = vmatprep.subr.mxu0 %v227
    %882 = vmatpush1.msra.mxu0 %v226
    %883 = vmatprep.subr.mxu0 %v229
    %884 = vmatpush1.msra.mxu0 %v228
    %885 = vmatprep.subr.mxu0 %v231
    %886 = vmatpush1.msra.mxu0 %v230
    %887 = vmatprep.subr.mxu0 %v233
    %888 = vmatpush1.msra.mxu0 %v232
    %889 = vmatprep.subr.mxu0 %v235
    %890 = vmatpush1.msra.mxu0 %v234
    %891 = vmatprep.subr.mxu0 %v237
    %892 = vmatpush1.msra.mxu0 %v236
    %893 = vmatprep.subr.mxu0 0.0
    %894 = vmatpush1.msra.mxu0 0.0
    %895 = vmatprep.subr.mxu0 0.0
    %896 = vmatpush1.msra.mxu0 0.0
    %897 = vmatprep.subr.mxu0 0.0
    %898 = vmatpush1.msra.mxu0 0.0
    %899 = vmatprep.subr.mxu0 0.0
    %900 = vmatpush1.msra.mxu0 0.0
    %901 = vmatprep.subr.mxu0 0.0
    %902 = vmatpush1.msra.mxu0 0.0
    %903 = vmatprep.subr.mxu0 0.0
    %904 = vmatpush1.msra.mxu0 0.0
    %905 = vmatprep.subr.mxu0 0.0
    %906 = vmatpush1.msra.mxu0 0.0
    %907 = vmatprep.subr.mxu0 0.0
    %908 = vmatpush1.msra.mxu0 0.0
    %909 = vmatprep.subr.mxu0 0.0
    %910 = vmatpush1.msra.mxu0 0.0
    %911 = vmatprep.subr.mxu0 0.0
    %912 = vmatpush1.msra.mxu0 0.0
    %913 = vmatprep.subr.mxu0 0.0
    %914 = vmatpush1.msra.mxu0 0.0
    %915 = vmatprep.subr.mxu0 0.0
    %916 = vmatpush1.msra.mxu0 0.0
    %917 = vmatprep.subr.mxu0 0.0
    %918 = vmatpush1.msra.mxu0 0.0
    %919 = vmatprep.subr.mxu0 0.0
    %920 = vmatpush1.msra.mxu0 0.0
    %921 = vmatprep.subr.mxu0 0.0
    %922 = vmatpush1.msra.mxu0 0.0
    %923 = vmatprep.subr.mxu0 0.0
    %924 = vmatpush1.msra.mxu0 0.0
    %925 = vmatprep.subr.mxu0 0.0
    %926 = vmatpush1.msra.mxu0 0.0
    %927 = vmatprep.subr.mxu0 0.0
    %928 = vmatpush1.msra.mxu0 0.0
    %929 = vmatprep.subr.mxu0 0.0
    %930 = vmatpush1.msra.mxu0 0.0
    %931 = vmatprep.subr.mxu0 0.0
    %932 = vmatpush1.msra.mxu0 0.0
    %933 = vmatprep.subr.mxu0 0.0
    %934 = vmatpush1.msra.mxu0 0.0
    %935 = vmatprep.subr.mxu0 0.0
    %936 = vmatpush1.msra.mxu0 0.0
    %937 = vmatprep.subr.mxu0 0.0
    %938 = vmatpush1.msra.mxu0 0.0
    %939 = vmatprep.subr.mxu0 0.0
    %940 = vmatpush1.msra.mxu0 0.0
    %941 = vmatprep.mubr.f32.mxu0 0.0
    %942 = vmatmul.mubr.f32.gmra.mrb[0].mxu0 %v875
    %v943 = vpop.f32.mrb[0].mxu0
    %v944 = vadd.f32 0.0, %v943
    %v945 = vpop.f32.mrb[0].mxu0
    %v946 = vadd.f32 0.0, %v945
    %947 = vdwg.mxu0
    %v948 = vadd.f32 %v870, %v944
    %v949 = vadd.f32 %v871, %v946
    %v950 = vxor.u32 %v948, 2147483648
    %v951 = vxor.u32 %v949, 2147483648
    %v952 = vmul.f32 %v950, 1.442695
    %v953 = vpow.pop %v952
    %v954 = vmul.f32 %v951, 1.442695
    %v955 = vpow.pop %v954
    %v956 = vadd.f32 %v953, 1.0
    %v957 = vadd.f32 %v955, 1.0
    %v958 = vrcp.pop %v956
    %v959 = vmul.f32 1.0, %v958
    %v960 = vrcp.pop %v957
    %v961 = vmul.f32 1.0, %v960
    %v962 = vtanh.pop %v949
    %v963 = vmul.f32 %v959, %v864
    %v964 = vmul.f32 %v959, %v962
    %966 = vrot.lane.b32.xlu0 %v964, 64
    %v967 = vpop.permute.xlu0 %966
    %v969 = vadd.f32 %v963, %v967
    %v970 = vtanh.pop %v969
    %v971 = vmul.f32 %v961, %v970
    %s972 = smul.u32 7, 2
    %s973 = smul.addr %s972, 8
    %s974 = scalar_lea.vmem [#allocation2], %s973
    %v975 = vld [vmem:[%s974] sm:$0xff]
    %v976 = vld [vmem:[%s974 + $0x8] sm:$0xff]
    %978 = vrot.lane.b32.xlu0 %v971, 64
    %v979 = vpop.permute.xlu0 %978
    %v980 = vsel %vm243, %v979, 0
    %982 = vmatprep.subr.mxu0 %v223
    %983 = vmatpush1.msra.mxu0 %v222
    %984 = vmatprep.subr.mxu0 %v225
    %985 = vmatpush1.msra.mxu0 %v224
    %986 = vmatprep.subr.mxu0 %v227
    %987 = vmatpush1.msra.mxu0 %v226
    %988 = vmatprep.subr.mxu0 %v229
    %989 = vmatpush1.msra.mxu0 %v228
    %990 = vmatprep.subr.mxu0 %v231
    %991 = vmatpush1.msra.mxu0 %v230
    %992 = vmatprep.subr.mxu0 %v233
    %993 = vmatpush1.msra.mxu0 %v232
    %994 = vmatprep.subr.mxu0 %v235
    %995 = vmatpush1.msra.mxu0 %v234
    %996 = vmatprep.subr.mxu0 %v237
    %997 = vmatpush1.msra.mxu0 %v236
    %998 = vmatprep.subr.mxu0 0.0
    %999 = vmatpush1.msra.mxu0 0.0
    %1000 = vmatprep.subr.mxu0 0.0
    %1001 = vmatpush1.msra.mxu0 0.0
    %1002 = vmatprep.subr.mxu0 0.0
    %1003 = vmatpush1.msra.mxu0 0.0
    %1004 = vmatprep.subr.mxu0 0.0
    %1005 = vmatpush1.msra.mxu0 0.0
    %1006 = vmatprep.subr.mxu0 0.0
    %1007 = vmatpush1.msra.mxu0 0.0
    %1008 = vmatprep.subr.mxu0 0.0
    %1009 = vmatpush1.msra.mxu0 0.0
    %1010 = vmatprep.subr.mxu0 0.0
    %1011 = vmatpush1.msra.mxu0 0.0
    %1012 = vmatprep.subr.mxu0 0.0
    %1013 = vmatpush1.msra.mxu0 0.0
    %1014 = vmatprep.subr.mxu0 0.0
    %1015 = vmatpush1.msra.mxu0 0.0
    %1016 = vmatprep.subr.mxu0 0.0
    %1017 = vmatpush1.msra.mxu0 0.0
    %1018 = vmatprep.subr.mxu0 0.0
    %1019 = vmatpush1.msra.mxu0 0.0
    %1020 = vmatprep.subr.mxu0 0.0
    %1021 = vmatpush1.msra.mxu0 0.0
    %1022 = vmatprep.subr.mxu0 0.0
    %1023 = vmatpush1.msra.mxu0 0.0
    %1024 = vmatprep.subr.mxu0 0.0
    %1025 = vmatpush1.msra.mxu0 0.0
    %1026 = vmatprep.subr.mxu0 0.0
    %1027 = vmatpush1.msra.mxu0 0.0
    %1028 = vmatprep.subr.mxu0 0.0
    %1029 = vmatpush1.msra.mxu0 0.0
    %1030 = vmatprep.subr.mxu0 0.0
    %1031 = vmatpush1.msra.mxu0 0.0
    %1032 = vmatprep.subr.mxu0 0.0
    %1033 = vmatpush1.msra.mxu0 0.0
    %1034 = vmatprep.subr.mxu0 0.0
    %1035 = vmatpush1.msra.mxu0 0.0
    %1036 = vmatprep.subr.mxu0 0.0
    %1037 = vmatpush1.msra.mxu0 0.0
    %1038 = vmatprep.subr.mxu0 0.0
    %1039 = vmatpush1.msra.mxu0 0.0
    %1040 = vmatprep.subr.mxu0 0.0
    %1041 = vmatpush1.msra.mxu0 0.0
    %1042 = vmatprep.subr.mxu0 0.0
    %1043 = vmatpush1.msra.mxu0 0.0
    %1044 = vmatprep.subr.mxu0 0.0
    %1045 = vmatpush1.msra.mxu0 0.0
    %1046 = vmatprep.mubr.f32.mxu0 0.0
    %1047 = vmatmul.mubr.f32.gmra.mrb[0].mxu0 %v980
    %v1048 = vpop.f32.mrb[0].mxu0
    %v1049 = vadd.f32 0.0, %v1048
    %v1050 = vpop.f32.mrb[0].mxu0
    %v1051 = vadd.f32 0.0, %v1050
    %1052 = vdwg.mxu0
    %v1053 = vadd.f32 %v975, %v1049
    %v1054 = vadd.f32 %v976, %v1051
    %v1055 = vxor.u32 %v1053, 2147483648
    %v1056 = vxor.u32 %v1054, 2147483648
    %v1057 = vmul.f32 %v1055, 1.442695
    %v1058 = vpow.pop %v1057
    %v1059 = vmul.f32 %v1056, 1.442695
    %v1060 = vpow.pop %v1059
    %v1061 = vadd.f32 %v1058, 1.0
    %v1062 = vadd.f32 %v1060, 1.0
    %v1063 = vrcp.pop %v1061
    %v1064 = vmul.f32 1.0, %v1063
    %v1065 = vrcp.pop %v1062
    %v1066 = vmul.f32 1.0, %v1065
    %v1067 = vtanh.pop %v1054
    %v1068 = vmul.f32 %v1064, %v969
    %v1069 = vmul.f32 %v1064, %v1067
    %1071 = vrot.lane.b32.xlu0 %v1069, 64
    %v1072 = vpop.permute.xlu0 %1071
    %v1074 = vadd.f32 %v1068, %v1072
    %v1075 = vtanh.pop %v1074
    %v1076 = vmul.f32 %v1066, %v1075
    %v1077 = vld [vmem:[%s4] sm:$0x1]
    %v1079 = vlaneseq
    %v1080 = vshrl.u32 %v1079, 7
    %v1081 = vsub.s32 0, %v1080
    %v1082 = vrot.slane %v1077, %v1081
    %1083 = vrot.lane.b32.xlu0 %v1082, 64
    %v1084 = vpop.permute.xlu0 %1083
    %v1086 = vmul.f32 %v1076, %v1084
    %1088 = vrot.lane.b32.xlu0 %v1086, 64
    %v1089 = vpop.permute.xlu0 %1088
    %v1091 = vsel %vm243, %v1089, 0.0
    %1092 = vadd.xlane.f32.xlu0 %v1091
    %v1093 = vpop.xlane.xlu0 %1092
    %v1094 = vld [vmem:[#allocation3] sm:$0x1]
    %v1096 = vlaneseq
    %v1097 = vshrl.u32 %v1096, 7
    %v1098 = vsub.s32 0, %v1097
    %v1099 = vrot.slane %v1094, %v1098
    %v1101 = vadd.f32 %v1093, %v1099
    %vm1102 = vcmask 7168
    %1103 = vst.msk [vmem:[%s6] sm:$0xff] %vm1102, %v1101
    // Predicated region
    $region30: #{tpu_custom_call.1} parent=1 // pred_check
      _
    $region31: #{tpu_custom_call.1} parent=1 // pred_check_branch
      %1105 = sbr.rel (0) target = $region33
    $region32: #{tpu_custom_call.1} parent=1 // pred_region
      _
    $region33: #{tpu_custom_call.1} parent=1 // pred_fallthru
      _
    // Predicated region
    $region34: #{tpu_custom_call.1} parent=1 // pred_check
      _
    $region35: #{tpu_custom_call.1} parent=1 // pred_check_branch
      %1107 = sbr.rel (0) target = $region37
    $region36: #{tpu_custom_call.1} parent=1 // pred_region
      _
    $region37: #{tpu_custom_call.1} parent=1 // pred_fallthru
      _
    %1108 = vsyncpa [#allocation5], 1

</llo_original>
